<compile_context>
chip_gen: v5e
topology: v5e:2x2
jax: 0.10.0
libtpu: 0.0.40
codegen_flags: <defaults>
</compile_context>

<pallas_src>
import functools

import jax
import jax.numpy as jnp
from jax.experimental import pallas as pl
from jax.experimental.pallas import tpu as pltpu


def _round_up(n, m):
    return ((n + m - 1) // m) * m


def _sigmoid(x):
    # Exact sigmoid via a single EUP tanh; keeps the VALU out of the serial path.
    return 0.5 * jnp.tanh(0.5 * x) + 0.5


def mlp_kernel(x_ref, w1_ref, b1_ref, w2_ref, b2_ref, o_ref):
    # Layer 1: (tile_b, IN) @ (IN, H) -> f32 accumulation on the MXU.
    h = jnp.dot(x_ref[...], w1_ref[...], preferred_element_type=jnp.float32)
    h = _sigmoid(h + b1_ref[...])                      # (tile_b, H) + (1, H), f32 math
    # Layer 2: cast only the matmul operand back to the weight dtype (bf16 by default).
    y = jnp.dot(h.astype(w2_ref.dtype), w2_ref[...],
                preferred_element_type=jnp.float32)
    o_ref[...] = _sigmoid(y + b2_ref[...]).astype(o_ref.dtype)


def _pick_tile_b(B):
    """Batch-tile heuristic: 1 step for tiny B, 2 equal steps for mid B (keeps both
    v7x TensorCores busy; ~0.35us extra on single-TC v5e/v6e), 1024-row tiles beyond."""
    b8 = _round_up(B, 8)
    if b8 <= 128:
        return b8
    if b8 <= 2048:
        return _round_up(pl.cdiv(b8, 2), 8)
    return 1024


def prepare_params(w1, b1, w2, b2, compute_dtype=jnp.bfloat16):
    """One-time parameter prep (cast weights to the MXU compute dtype, biases to f32
    row vectors).  Do this once and reuse for repeated calls."""
    w1 = jnp.asarray(w1).astype(compute_dtype)
    w2 = jnp.asarray(w2).astype(compute_dtype)
    b1 = jnp.asarray(b1, jnp.float32).reshape(1, -1)
    b2 = jnp.asarray(b2, jnp.float32).reshape(1, -1)
    return w1, b1, w2, b2


def apply_prepared(x, w1, b1, w2, b2, *, tile_b=None):
    """Hot path: x (B, in_dim) f32, params already prepared via prepare_params."""
    B, in_dim = x.shape
    in_dim_w, h_dim = w1.shape
    h_dim_w, out_dim = w2.shape
    assert in_dim == in_dim_w and h_dim == h_dim_w

    if tile_b is None:
        tile_b = _pick_tile_b(B)
    tile_b = max(8, _round_up(min(tile_b, _round_up(B, 8)), 8))
    b_p = _round_up(B, tile_b)

    x_p = x.astype(w1.dtype)
    if b_p != B:
        x_p = jnp.pad(x_p, ((0, b_p - B), (0, 0)))

    grid = (b_p // tile_b,)

    out = pl.pallas_call(
        mlp_kernel,
        out_shape=jax.ShapeDtypeStruct((b_p, out_dim), jnp.float32),
        grid_spec=pltpu.PrefetchScalarGridSpec(
            num_scalar_prefetch=0,
            grid=grid,
            in_specs=[
                # x: batch-tiled, full (unpadded) feature dim.
                pl.BlockSpec((tile_b, in_dim), lambda i: (i, 0)),
                # Weights / biases: constant index map -> VMEM-resident across steps.
                # TODO(synk): add K/N tiling + Buffered(1) weight specs if feature dims
                # ever grow near v7x's 64 MiB VMEM budget; trivially small here.
                pl.BlockSpec((in_dim, h_dim), lambda i: (0, 0)),
                pl.BlockSpec((1, h_dim), lambda i: (0, 0)),
                pl.BlockSpec((h_dim, out_dim), lambda i: (0, 0)),
                pl.BlockSpec((1, out_dim), lambda i: (0, 0)),
            ],
            out_specs=pl.BlockSpec((tile_b, out_dim), lambda i: (i, 0)),
        ),
        compiler_params=pltpu.CompilerParams(
            # Batch steps are independent -> shard across both TCs on v7x.
            dimension_semantics=("parallel",),
        ),
    )(x_p, w1, b1, w2, b2)

    return out if b_p == B else out[:B]


@functools.partial(jax.jit, static_argnames=("tile_b", "compute_dtype"))
def sequential_perception(x, w1, b1, w2, b2, *, tile_b=None,
                          compute_dtype=jnp.bfloat16):
    """Convenience wrapper matching the PyTorch module's forward().
    x: (B, in_dim) f32; w1: (in_dim, h_dim); b1: (h_dim,); w2: (h_dim, out_dim);
    b2: (out_dim,).  Returns (B, out_dim) f32."""
    w1p, b1p, w2p, b2p = prepare_params(w1, b1, w2, b2, compute_dtype=compute_dtype)
    return apply_prepared(x, w1p, b1p, w2p, b2p, tile_b=tile_b)


def reference(x, w1, b1, w2, b2):
    h = jax.nn.sigmoid(x @ w1 + b1)
    return jax.nn.sigmoid(h @ w2 + b2)


if __name__ == "__main__":
    # Module-implied sizes (in_dim=32, h_dim=64, out_dim=16); batch 256 exercises the
    # 2-step parallel batch grid (128 rows per step, no batch padding).
    B, IN, H, OUT = 256, 32, 64, 16

    key = jax.random.PRNGKey(0)
    kx, kw1, kb1, kw2, kb2 = jax.random.split(key, 5)

    # torch.randn-style standard-normal params, deterministic via PRNGKey(0).
    x = jax.random.normal(kx, (B, IN), dtype=jnp.float32)
    w1 = jax.random.normal(kw1, (IN, H), dtype=jnp.float32)
    b1 = jax.random.normal(kb1, (H,), dtype=jnp.float32)
    w2 = jax.random.normal(kw2, (H, OUT), dtype=jnp.float32)
    b2 = jax.random.normal(kb2, (OUT,), dtype=jnp.float32)

    ref = reference(x, w1, b1, w2, b2)

    # Exact-precision path: f32 MXU operands must match the reference tightly.
    out_f32 = sequential_perception(x, w1, b1, w2, b2, compute_dtype=jnp.float32)
    out_f32 = jax.block_until_ready(out_f32)
    assert out_f32.shape == (B, OUT)
    assert jnp.max(jnp.abs(out_f32 - ref)) < 1e-3

    # Default fast path: bf16 MXU operands, f32 accumulation / element-wise math.
    out_bf16 = sequential_perception(x, w1, b1, w2, b2)
    out_bf16 = jax.block_until_ready(out_bf16)
    assert out_bf16.shape == (B, OUT)
    # Tolerance reflects bf16 quantization of x/W before the matmuls (sigmoid outputs
    # live in [0, 1], so this is an absolute-error bound).
    assert jnp.max(jnp.abs(out_bf16 - ref)) < 5e-2

    print("KERNEL_OK")
</pallas_src>

<mosaic_0001>
module attributes {stable_mosaic.version = 11 : i64} {
  func.func @mlp_kernel(%arg0: i32, %arg1: memref<128x32xf32, #tpu.memory_space<vmem>>, %arg2: memref<32x64xf32, #tpu.memory_space<vmem>>, %arg3: memref<1x64xf32, #tpu.memory_space<vmem>>, %arg4: memref<64x16xf32, #tpu.memory_space<vmem>>, %arg5: memref<1x16xf32, #tpu.memory_space<vmem>>, %arg6: memref<128x16xf32, #tpu.memory_space<vmem>>) attributes {dimension_semantics = [#tpu.dimension_semantics<parallel>], iteration_bounds = array<i64: 2>, scalar_prefetch = 0 : i64, scratch_operands = 0 : i64, tpu.core_type = #tpu.core_type<tc>, window_params = [{transform_indices = @transform_0, window_bounds = array<i64: 128, 32>}, {pipeline_mode = #tpu.pipeline_mode<synchronous>, transform_indices = @transform_1, window_bounds = array<i64: 32, 64>}, {pipeline_mode = #tpu.pipeline_mode<synchronous>, transform_indices = @transform_2, window_bounds = array<i64: 1, 64>}, {pipeline_mode = #tpu.pipeline_mode<synchronous>, transform_indices = @transform_3, window_bounds = array<i64: 64, 16>}, {pipeline_mode = #tpu.pipeline_mode<synchronous>, transform_indices = @transform_4, window_bounds = array<i64: 1, 16>}, {transform_indices = @transform_5, window_bounds = array<i64: 128, 16>}]} {
    %c0 = arith.constant 0 : index
    %c0_0 = arith.constant 0 : index
    %0 = vector.load %arg1[%c0, %c0_0] : memref<128x32xf32, #tpu.memory_space<vmem>>, vector<128x32xf32>
    %c0_1 = arith.constant 0 : index
    %c0_2 = arith.constant 0 : index
    %1 = vector.load %arg2[%c0_1, %c0_2] : memref<32x64xf32, #tpu.memory_space<vmem>>, vector<32x64xf32>
    %cst = arith.constant dense<0.000000e+00> : vector<128x64xf32>
    %2 = tpu.matmul %0, %1, %cst {dimension_numbers = #tpu.dot_dimension_numbers<[1], [0], [0], [1], [0, 0, 1, 1], [], []>} : vector<128x32xf32>, vector<32x64xf32>, vector<128x64xf32> -> vector<128x64xf32>
    %c0_3 = arith.constant 0 : index
    %c0_4 = arith.constant 0 : index
    %3 = vector.load %arg3[%c0_3, %c0_4] : memref<1x64xf32, #tpu.memory_space<vmem>>, vector<1x64xf32>
    %4 = vector.broadcast %3 : vector<1x64xf32> to vector<128x64xf32>
    %5 = arith.addf %2, %4 : vector<128x64xf32>
    %cst_5 = arith.constant 5.000000e-01 : f32
    %6 = vector.broadcast %cst_5 : f32 to vector<128x64xf32>
    %7 = arith.mulf %6, %5 : vector<128x64xf32>
    %8 = math.tanh %7 : vector<128x64xf32>
    %cst_6 = arith.constant 5.000000e-01 : f32
    %9 = vector.broadcast %cst_6 : f32 to vector<128x64xf32>
    %10 = arith.mulf %9, %8 : vector<128x64xf32>
    %cst_7 = arith.constant 5.000000e-01 : f32
    %11 = vector.broadcast %cst_7 : f32 to vector<128x64xf32>
    %12 = arith.addf %10, %11 : vector<128x64xf32>
    %c0_8 = arith.constant 0 : index
    %c0_9 = arith.constant 0 : index
    %13 = vector.load %arg4[%c0_8, %c0_9] : memref<64x16xf32, #tpu.memory_space<vmem>>, vector<64x16xf32>
    %cst_10 = arith.constant dense<0.000000e+00> : vector<128x16xf32>
    %14 = tpu.matmul %12, %13, %cst_10 {dimension_numbers = #tpu.dot_dimension_numbers<[1], [0], [0], [1], [0, 0, 1, 1], [], []>} : vector<128x64xf32>, vector<64x16xf32>, vector<128x16xf32> -> vector<128x16xf32>
    %c0_11 = arith.constant 0 : index
    %c0_12 = arith.constant 0 : index
    %15 = vector.load %arg5[%c0_11, %c0_12] : memref<1x16xf32, #tpu.memory_space<vmem>>, vector<1x16xf32>
    %16 = vector.broadcast %15 : vector<1x16xf32> to vector<128x16xf32>
    %17 = arith.addf %14, %16 : vector<128x16xf32>
    %cst_13 = arith.constant 5.000000e-01 : f32
    %18 = vector.broadcast %cst_13 : f32 to vector<128x16xf32>
    %19 = arith.mulf %18, %17 : vector<128x16xf32>
    %20 = math.tanh %19 : vector<128x16xf32>
    %cst_14 = arith.constant 5.000000e-01 : f32
    %21 = vector.broadcast %cst_14 : f32 to vector<128x16xf32>
    %22 = arith.mulf %21, %20 : vector<128x16xf32>
    %cst_15 = arith.constant 5.000000e-01 : f32
    %23 = vector.broadcast %cst_15 : f32 to vector<128x16xf32>
    %24 = arith.addf %22, %23 : vector<128x16xf32>
    %c0_16 = arith.constant 0 : index
    %c0_17 = arith.constant 0 : index
    %25 = vector.load %arg6[%c0_16, %c0_17] : memref<128x16xf32, #tpu.memory_space<vmem>>, vector<128x16xf32>
    tpu.vector_store %arg6[%c0_16, %c0_17], %24 {strides = array<i32>} : memref<128x16xf32, #tpu.memory_space<vmem>>, vector<128x16xf32>,
    return
  }
  func.func @transform_0(%arg0: i32) -> (i32, i32) {
    %c0_i32 = arith.constant 0 : i32
    %c0_i32_0 = arith.constant 0 : i32
    return %arg0, %c0_i32 : i32, i32
  }
  func.func @transform_1(%arg0: i32) -> (i32, i32) {
    %c0_i32 = arith.constant 0 : i32
    %c0_i32_0 = arith.constant 0 : i32
    %c0_i32_1 = arith.constant 0 : i32
    return %c0_i32, %c0_i32_0 : i32, i32
  }
  func.func @transform_2(%arg0: i32) -> (i32, i32) {
    %c0_i32 = arith.constant 0 : i32
    %c0_i32_0 = arith.constant 0 : i32
    %c0_i32_1 = arith.constant 0 : i32
    return %c0_i32, %c0_i32_0 : i32, i32
  }
  func.func @transform_3(%arg0: i32) -> (i32, i32) {
    %c0_i32 = arith.constant 0 : i32
    %c0_i32_0 = arith.constant 0 : i32
    %c0_i32_1 = arith.constant 0 : i32
    return %c0_i32, %c0_i32_0 : i32, i32
  }
  func.func @transform_4(%arg0: i32) -> (i32, i32) {
    %c0_i32 = arith.constant 0 : i32
    %c0_i32_0 = arith.constant 0 : i32
    %c0_i32_1 = arith.constant 0 : i32
    return %c0_i32, %c0_i32_0 : i32, i32
  }
  func.func @transform_5(%arg0: i32) -> (i32, i32) {
    %c0_i32 = arith.constant 0 : i32
    %c0_i32_0 = arith.constant 0 : i32
    return %arg0, %c0_i32 : i32, i32
  }
}

</mosaic_0001>

<llo_original>
// kernel: sequential_perception.1
$region0: #{sequential_perception.1}
  #allocation0 [shape = 'u32[]', space=smem, size = 0x4, offset = 0x4, fixed_abs, tag = 'smem constant byte address 0x4 - core index']
  #allocation1 [shape = 'u32[72,128]{1,0:T(1,128)}', space=vmem, size = 0x9000, scoped, tag = 'internal scratch']
  %s0 = inlined_call_operand.vmem [shape: f32[256,32], index: 0, kind: input, shape index: {}]
  %s1 = inlined_call_operand.vmem [shape: f32[32,64], index: 1, kind: input, shape index: {}]
  %s2 = inlined_call_operand.vmem [shape: f32[1,64], index: 2, kind: input, shape index: {}]
  %s3 = inlined_call_operand.vmem [shape: f32[64,16], index: 3, kind: input, shape index: {}]
  %s4 = inlined_call_operand.vmem [shape: f32[1,16], index: 4, kind: input, shape index: {}]
  %s5 = inlined_call_operand.vmem [shape: f32[256,16], index: 5, kind: output, shape index: {}]
  %s6 = sld [smem:[#allocation0]]
  $region53: #{sequential_perception.1} parent=0
    _
  %s8 = ssub.s32 1, %s6
  %s9 = scalar_select 0, %s8, %s6
  loop: start=0, step=1, limit=4
  $region2: #{sequential_perception.1} parent=0 // loop_pre_header
    _
  $region3: #{sequential_perception.1} parent=0 // loop_header
    %s11 = sphi 0, %s15
    %p12 = scmp.ge.s32.totalorder %s11, 4
    %s21 = sphi 0, %s23
    %s24 = sphi 0, %s21
    %s25 = sphi 0, %s24
    %s41 = sphi 0, %s25
    %s45 = sphi 0, %s45
    %s47 = sphi 0, %s45
    %s48 = sphi 0, %s47
    %s62 = sphi 0, %s48
    %s66 = sphi 0, %s66
    %s68 = sphi 0, %s66
    %s69 = sphi 0, %s68
    %s83 = sphi 0, %s69
    %s87 = sphi 0, %s87
    %s89 = sphi 0, %s87
    %s90 = sphi 0, %s89
    %s104 = sphi 0, %s90
    %s108 = sphi 0, %s108
    %s110 = sphi 0, %s108
    %s111 = sphi 0, %s110
    %s125 = sphi 0, %s111
    %s131 = sphi 0, %s133
    %s134 = sphi 0, %s131
    %s135 = sphi 0, %s134
    %s151 = sphi 0, %s135
  $region4: #{sequential_perception.1} parent=0 // loop_header_branch
    %14 = sbr.rel (%p12) target = $region8
  $region5: #{sequential_perception.1} parent=0 // loop_body
    %s16 = ssub.s32 %s11, 1
    %s17 = ssub.s32 %s11, 2
    %s18 = sadd.s32 %s11, 1
    %s19 = ssub.s32 %s11, %s18
    %p20 = scmp.eq.s32.totalorder %s19, 0
    %s22 = sadd.s32 %s21, 1
    %s23 = scalar_select %p20, %s21, %s22
    %p26 = pneg %p20
    %p27 = scmp.eq.s32.totalorder %s11, 1
    %p28 = por %p26, %p27
    %p29 = scmp.ne.s32.totalorder %s21, %s24
    %p30 = scmp.eq.s32.totalorder %s11, 0
    %p31 = por %p29, %p30
    %p32 = scmp.ne.s32.totalorder %s21, %s24
    %p33 = scmp.eq.s32.totalorder %s16, 1
    %p34 = por %p32, %p33
    %p35 = scmp.ne.s32.totalorder %s24, %s25
    %p36 = scmp.eq.s32.totalorder %s16, 0
    %p37 = por %p35, %p36
    %p38 = scmp.ne.s32.totalorder %s24, %s25
    %p39 = scmp.eq.s32.totalorder %s17, 1
    %p40 = por %p38, %p39
    %p42 = scmp.ne.s32.totalorder %s25, %s41
    %p43 = scmp.eq.s32.totalorder %s17, 0
    %p44 = por %p42, %p43
    %s46 = sadd.s32 %s45, 1
    %p49 = scmp.eq.s32.totalorder %s11, 1
    %p50 = scmp.ne.s32.totalorder %s45, %s47
    %p51 = scmp.eq.s32.totalorder %s11, 0
    %p52 = por %p50, %p51
    %p53 = scmp.ne.s32.totalorder %s45, %s47
    %p54 = scmp.eq.s32.totalorder %s16, 1
    %p55 = por %p53, %p54
    %p56 = scmp.ne.s32.totalorder %s47, %s48
    %p57 = scmp.eq.s32.totalorder %s16, 0
    %p58 = por %p56, %p57
    %p59 = scmp.ne.s32.totalorder %s47, %s48
    %p60 = scmp.eq.s32.totalorder %s17, 1
    %p61 = por %p59, %p60
    %p63 = scmp.ne.s32.totalorder %s48, %s62
    %p64 = scmp.eq.s32.totalorder %s17, 0
    %p65 = por %p63, %p64
    %s67 = sadd.s32 %s66, 1
    %p70 = scmp.eq.s32.totalorder %s11, 1
    %p71 = scmp.ne.s32.totalorder %s66, %s68
    %p72 = scmp.eq.s32.totalorder %s11, 0
    %p73 = por %p71, %p72
    %p74 = scmp.ne.s32.totalorder %s66, %s68
    %p75 = scmp.eq.s32.totalorder %s16, 1
    %p76 = por %p74, %p75
    %p77 = scmp.ne.s32.totalorder %s68, %s69
    %p78 = scmp.eq.s32.totalorder %s16, 0
    %p79 = por %p77, %p78
    %p80 = scmp.ne.s32.totalorder %s68, %s69
    %p81 = scmp.eq.s32.totalorder %s17, 1
    %p82 = por %p80, %p81
    %p84 = scmp.ne.s32.totalorder %s69, %s83
    %p85 = scmp.eq.s32.totalorder %s17, 0
    %p86 = por %p84, %p85
    %s88 = sadd.s32 %s87, 1
    %p91 = scmp.eq.s32.totalorder %s11, 1
    %p92 = scmp.ne.s32.totalorder %s87, %s89
    %p93 = scmp.eq.s32.totalorder %s11, 0
    %p94 = por %p92, %p93
    %p95 = scmp.ne.s32.totalorder %s87, %s89
    %p96 = scmp.eq.s32.totalorder %s16, 1
    %p97 = por %p95, %p96
    %p98 = scmp.ne.s32.totalorder %s89, %s90
    %p99 = scmp.eq.s32.totalorder %s16, 0
    %p100 = por %p98, %p99
    %p101 = scmp.ne.s32.totalorder %s89, %s90
    %p102 = scmp.eq.s32.totalorder %s17, 1
    %p103 = por %p101, %p102
    %p105 = scmp.ne.s32.totalorder %s90, %s104
    %p106 = scmp.eq.s32.totalorder %s17, 0
    %p107 = por %p105, %p106
    %s109 = sadd.s32 %s108, 1
    %p112 = scmp.eq.s32.totalorder %s11, 1
    %p113 = scmp.ne.s32.totalorder %s108, %s110
    %p114 = scmp.eq.s32.totalorder %s11, 0
    %p115 = por %p113, %p114
    %p116 = scmp.ne.s32.totalorder %s108, %s110
    %p117 = scmp.eq.s32.totalorder %s16, 1
    %p118 = por %p116, %p117
    %p119 = scmp.ne.s32.totalorder %s110, %s111
    %p120 = scmp.eq.s32.totalorder %s16, 0
    %p121 = por %p119, %p120
    %p122 = scmp.ne.s32.totalorder %s110, %s111
    %p123 = scmp.eq.s32.totalorder %s17, 1
    %p124 = por %p122, %p123
    %p126 = scmp.ne.s32.totalorder %s111, %s125
    %p127 = scmp.eq.s32.totalorder %s17, 0
    %p128 = por %p126, %p127
    %s129 = ssub.s32 %s11, %s18
    %p130 = scmp.eq.s32.totalorder %s129, 0
    %s132 = sadd.s32 %s131, 1
    %s133 = scalar_select %p130, %s131, %s132
    %p136 = pneg %p130
    %p137 = scmp.eq.s32.totalorder %s11, 1
    %p138 = por %p136, %p137
    %p139 = scmp.ne.s32.totalorder %s131, %s134
    %p140 = scmp.eq.s32.totalorder %s11, 0
    %p141 = por %p139, %p140
    %p142 = scmp.ne.s32.totalorder %s131, %s134
    %p143 = scmp.eq.s32.totalorder %s16, 1
    %p144 = por %p142, %p143
    %p145 = scmp.ne.s32.totalorder %s134, %s135
    %p146 = scmp.eq.s32.totalorder %s16, 0
    %p147 = por %p145, %p146
    %p148 = scmp.ne.s32.totalorder %s134, %s135
    %p149 = scmp.eq.s32.totalorder %s17, 1
    %p150 = por %p148, %p149
    %p152 = scmp.ne.s32.totalorder %s135, %s151
    %p153 = scmp.eq.s32.totalorder %s17, 0
    %p154 = por %p152, %p153
    %p155 = scmp.le.s32.totalorder 1, %s11
    %p156 = scmp.lt.s32.totalorder %s11, 3
    %p157 = pnand %p155, %p156
    %p158 = pneg %p157
    // Predicated region
    $region9: #{sequential_perception.1} parent=5 // pred_check
      _
    $region10: #{sequential_perception.1} parent=5 // pred_check_branch
      %160 = sbr.rel (%p157) target = $region12
    $region11: #{sequential_perception.1} parent=5 // pred_region
      %s161 = ssub.s32 %s11, 1
      // Predicated region
      $region13: #{sequential_perception.1} parent=11 // pred_check
        %p162 = pneg %p58
      $region14: #{sequential_perception.1} parent=11 // pred_check_branch
        %164 = sbr.rel (%p162) target = $region16
      $region15: #{sequential_perception.1} parent=11 // pred_region
        _
      $region16: #{sequential_perception.1} parent=11 // pred_fallthru
        _
      // Predicated region
      $region17: #{sequential_perception.1} parent=11 // pred_check
        %p165 = pneg %p79
      $region18: #{sequential_perception.1} parent=11 // pred_check_branch
        %167 = sbr.rel (%p165) target = $region20
      $region19: #{sequential_perception.1} parent=11 // pred_region
        _
      $region20: #{sequential_perception.1} parent=11 // pred_fallthru
        _
      // Predicated region
      $region21: #{sequential_perception.1} parent=11 // pred_check
        %p168 = pneg %p100
      $region22: #{sequential_perception.1} parent=11 // pred_check_branch
        %170 = sbr.rel (%p168) target = $region24
      $region23: #{sequential_perception.1} parent=11 // pred_region
        _
      $region24: #{sequential_perception.1} parent=11 // pred_fallthru
        _
      // Predicated region
      $region25: #{sequential_perception.1} parent=11 // pred_check
        %p171 = pneg %p121
      $region26: #{sequential_perception.1} parent=11 // pred_check_branch
        %173 = sbr.rel (%p171) target = $region28
      $region27: #{sequential_perception.1} parent=11 // pred_region
        _
      $region28: #{sequential_perception.1} parent=11 // pred_fallthru
        _
    $region12: #{sequential_perception.1} parent=5 // pred_fallthru
      _
    %p174 = scmp.lt.s32.totalorder %s11, 2
    // Predicated region
    $region29: #{sequential_perception.1} parent=5 // pred_check
      %p175 = pneg %p174
    $region30: #{sequential_perception.1} parent=5 // pred_check_branch
      %177 = sbr.rel (%p175) target = $region32
    $region31: #{sequential_perception.1} parent=5 // pred_region
      // Predicated region
      $region33: #{sequential_perception.1} parent=31 // pred_check
        %p178 = pneg %p31
      $region34: #{sequential_perception.1} parent=31 // pred_check_branch
        %180 = sbr.rel (%p178) target = $region36
      $region35: #{sequential_perception.1} parent=31 // pred_region
        %s181 = smul.u32 16, %s11
        %p182 = scmp.lt.s32.totalorder %s181, 31
        %s183 = scalar_select %p182, %s181, 31
        %s184 = smul.addr %s183, 8
        %s185 = scalar_lea.vmem %s0, %s184
        %s186 = smul.u32 16, %s11
      $region36: #{sequential_perception.1} parent=31 // pred_fallthru
        _
    $region32: #{sequential_perception.1} parent=5 // pred_fallthru
      _
    %p187 = scmp.le.s32.totalorder 1, %s11
    %p188 = scmp.lt.s32.totalorder %s11, 3
    %p189 = pnand %p187, %p188
    %p190 = pneg %p189
    // Predicated region
    $region37: #{sequential_perception.1} parent=5 // pred_check
      _
    $region38: #{sequential_perception.1} parent=5 // pred_check_branch
      %192 = sbr.rel (%p189) target = $region40
    $region39: #{sequential_perception.1} parent=5 // pred_region
      %s193 = ssub.s32 %s11, 1
      %s194 = smul.u32 16, %s16
      %p195 = scmp.lt.s32.totalorder %s194, 31
      %s196 = scalar_select %p195, %s194, 31
      %s197 = smul.addr %s196, 8
      %s198 = scalar_lea.vmem %s0, %s197
      %p199 = pneg %p37
      %p200 = pneg %p34
      %p201 = pneg %p58
      %p202 = pneg %p55
      %p203 = pneg %p79
      %p204 = pneg %p76
      %p205 = pneg %p100
      %p206 = pneg %p97
      %p207 = pneg %p121
      %p208 = pneg %p118
      %p209 = pneg %p147
      %p210 = pneg %p144
      %s211 = smul.u32 16, %s16
      %p212 = scmp.lt.s32.totalorder %s211, 31
      %s213 = scalar_select %p212, %s211, 31
      %s214 = smul.addr %s213, 8
      %s215 = scalar_lea.vmem %s5, %s214
      %s216 = smul.u32 16, %s16
      %p217 = scmp.lt.s32.totalorder %s216, 31
      %s218 = scalar_select %p217, %s216, 31
      %s219 = smul.addr %s218, 8
      %s220 = scalar_lea.vmem %s0, %s219
      %s221 = smul.u32 16, %s16
      %s222 = smul.u32 16, %s16
      %p223 = scmp.lt.s32.totalorder %s222, 31
      %s224 = scalar_select %p223, %s222, 31
      %s225 = smul.addr %s224, 8
      %s226 = scalar_lea.vmem %s5, %s225
      %s227 = smul.u32 16, %s16
      %v228 = vld [vmem:[%s220] sm:$0xff]
      %v229 = vld [vmem:[%s220 + $0x8] sm:$0xff]
      %v230 = vld [vmem:[%s220 + $0x10] sm:$0xff]
      %v231 = vld [vmem:[%s220 + $0x18] sm:$0xff]
      %v232 = vld [vmem:[%s220 + $0x20] sm:$0xff]
      %v233 = vld [vmem:[%s220 + $0x28] sm:$0xff]
      %v234 = vld [vmem:[%s220 + $0x30] sm:$0xff]
      %v235 = vld [vmem:[%s220 + $0x38] sm:$0xff]
      %v236 = vld [vmem:[%s220 + $0x40] sm:$0xff]
      %v237 = vld [vmem:[%s220 + $0x48] sm:$0xff]
      %v238 = vld [vmem:[%s220 + $0x50] sm:$0xff]
      %v239 = vld [vmem:[%s220 + $0x58] sm:$0xff]
      %v240 = vld [vmem:[%s220 + $0x60] sm:$0xff]
      %v241 = vld [vmem:[%s220 + $0x68] sm:$0xff]
      %v242 = vld [vmem:[%s220 + $0x70] sm:$0xff]
      %v243 = vld [vmem:[%s220 + $0x78] sm:$0xff]
      %v244 = vld [vmem:[%s1] sm:$0xff]
      %v245 = vld [vmem:[%s1 + $0x8] sm:$0xff]
      %v246 = vld [vmem:[%s1 + $0x10] sm:$0xff]
      %v247 = vld [vmem:[%s1 + $0x18] sm:$0xff]
      %v248 = vld [vmem:[%s2] sm:$0x1]
      %v250 = vperm.slane %v248, 0
      %vm252 = vcmask 261120
      %v254 = vsel %vm252, %v228, 0
      %v257 = vsel %vm252, %v229, 0
      %v260 = vsel %vm252, %v230, 0
      %v263 = vsel %vm252, %v231, 0
      %v266 = vsel %vm252, %v232, 0
      %v269 = vsel %vm252, %v233, 0
      %v272 = vsel %vm252, %v234, 0
      %v275 = vsel %vm252, %v235, 0
      %v278 = vsel %vm252, %v236, 0
      %v281 = vsel %vm252, %v237, 0
      %v284 = vsel %vm252, %v238, 0
      %v287 = vsel %vm252, %v239, 0
      %v290 = vsel %vm252, %v240, 0
      %v293 = vsel %vm252, %v241, 0
      %v296 = vsel %vm252, %v242, 0
      %v299 = vsel %vm252, %v243, 0
      %301 = vmatpush.msra.mxu0 0.0
      %302 = vmatpush.msra.mxu0 0.0
      %303 = vmatpush.msra.mxu0 0.0
      %304 = vmatpush.msra.mxu0 0.0
      %305 = vmatpush.msra.mxu0 0.0
      %306 = vmatpush.msra.mxu0 0.0
      %307 = vmatpush.msra.mxu0 0.0
      %308 = vmatpush.msra.mxu0 0.0
      %309 = vmatpush.msra.mxu0 0.0
      %310 = vmatpush.msra.mxu0 0.0
      %311 = vmatpush.msra.mxu0 0.0
      %312 = vmatpush.msra.mxu0 0.0
      %313 = vmatpush.msra.mxu0 %v247
      %314 = vmatpush.msra.mxu0 %v246
      %315 = vmatpush.msra.mxu0 %v245
      %316 = vmatpush.msra.mxu0 %v244
      %317 = vmatmul.f32.gmra.mxu0 %v254
      %v318 = vpop.f32.mrf.mxu0
      %v319 = vadd.f32 %v250, %v318
      %320 = vmatmul.f32.gmra.mxu0 %v257
      %v321 = vpop.f32.mrf.mxu0
      %v322 = vadd.f32 %v250, %v321
      %323 = vmatmul.f32.gmra.mxu0 %v260
      %v324 = vpop.f32.mrf.mxu0
      %v325 = vadd.f32 %v250, %v324
      %326 = vmatmul.f32.gmra.mxu0 %v263
      %v327 = vpop.f32.mrf.mxu0
      %v328 = vadd.f32 %v250, %v327
      %329 = vmatmul.f32.gmra.mxu0 %v266
      %v330 = vpop.f32.mrf.mxu0
      %v331 = vadd.f32 %v250, %v330
      %332 = vmatmul.f32.gmra.mxu0 %v269
      %v333 = vpop.f32.mrf.mxu0
      %v334 = vadd.f32 %v250, %v333
      %335 = vmatmul.f32.gmra.mxu0 %v272
      %v336 = vpop.f32.mrf.mxu0
      %v337 = vadd.f32 %v250, %v336
      %338 = vmatmul.f32.gmra.mxu0 %v275
      %v339 = vpop.f32.mrf.mxu0
      %v340 = vadd.f32 %v250, %v339
      %341 = vmatmul.f32.gmra.mxu0 %v278
      %v342 = vpop.f32.mrf.mxu0
      %v343 = vadd.f32 %v250, %v342
      %344 = vmatmul.f32.gmra.mxu0 %v281
      %v345 = vpop.f32.mrf.mxu0
      %v346 = vadd.f32 %v250, %v345
      %347 = vmatmul.f32.gmra.mxu0 %v284
      %v348 = vpop.f32.mrf.mxu0
      %v349 = vadd.f32 %v250, %v348
      %350 = vmatmul.f32.gmra.mxu0 %v287
      %v351 = vpop.f32.mrf.mxu0
      %v352 = vadd.f32 %v250, %v351
      %353 = vmatmul.f32.gmra.mxu0 %v290
      %v354 = vpop.f32.mrf.mxu0
      %v355 = vadd.f32 %v250, %v354
      %356 = vmatmul.f32.gmra.mxu0 %v293
      %v357 = vpop.f32.mrf.mxu0
      %v358 = vadd.f32 %v250, %v357
      %359 = vmatmul.f32.gmra.mxu0 %v296
      %v360 = vpop.f32.mrf.mxu0
      %v361 = vadd.f32 %v250, %v360
      %362 = vmatmul.f32.gmra.mxu0 %v299
      %v363 = vpop.f32.mrf.mxu0
      %v364 = vadd.f32 %v250, %v363
      %365 = vdwg.mxu0
      %v366 = vmul.f32 %v319, 0.5
      %v367 = vmul.f32 %v322, 0.5
      %v368 = vmul.f32 %v325, 0.5
      %v369 = vmul.f32 %v328, 0.5
      %v370 = vmul.f32 %v331, 0.5
      %v371 = vmul.f32 %v334, 0.5
      %v372 = vmul.f32 %v337, 0.5
      %v373 = vmul.f32 %v340, 0.5
      %v374 = vmul.f32 %v343, 0.5
      %v375 = vmul.f32 %v346, 0.5
      %v376 = vmul.f32 %v349, 0.5
      %v377 = vmul.f32 %v352, 0.5
      %v378 = vmul.f32 %v355, 0.5
      %v379 = vmul.f32 %v358, 0.5
      %v380 = vmul.f32 %v361, 0.5
      %v381 = vmul.f32 %v364, 0.5
      %v382 = vtanh.pop %v366
      %v383 = vtanh.pop %v367
      %v384 = vtanh.pop %v368
      %v385 = vtanh.pop %v369
      %v386 = vtanh.pop %v370
      %v387 = vtanh.pop %v371
      %v388 = vtanh.pop %v372
      %v389 = vtanh.pop %v373
      %v390 = vtanh.pop %v374
      %v391 = vtanh.pop %v375
      %v392 = vtanh.pop %v376
      %v393 = vtanh.pop %v377
      %v394 = vtanh.pop %v378
      %v395 = vtanh.pop %v379
      %v396 = vtanh.pop %v380
      %v397 = vtanh.pop %v381
      %v398 = vmul.f32 %v382, 0.5
      %v399 = vmul.f32 %v383, 0.5
      %v400 = vmul.f32 %v384, 0.5
      %v401 = vmul.f32 %v385, 0.5
      %v402 = vmul.f32 %v386, 0.5
      %v403 = vmul.f32 %v387, 0.5
      %v404 = vmul.f32 %v388, 0.5
      %v405 = vmul.f32 %v389, 0.5
      %v406 = vmul.f32 %v390, 0.5
      %v407 = vmul.f32 %v391, 0.5
      %v408 = vmul.f32 %v392, 0.5
      %v409 = vmul.f32 %v393, 0.5
      %v410 = vmul.f32 %v394, 0.5
      %v411 = vmul.f32 %v395, 0.5
      %v412 = vmul.f32 %v396, 0.5
      %v413 = vmul.f32 %v397, 0.5
      %v414 = vadd.f32 %v398, 0.5
      %v415 = vadd.f32 %v399, 0.5
      %v416 = vadd.f32 %v400, 0.5
      %v417 = vadd.f32 %v401, 0.5
      %v418 = vadd.f32 %v402, 0.5
      %v419 = vadd.f32 %v403, 0.5
      %v420 = vadd.f32 %v404, 0.5
      %v421 = vadd.f32 %v405, 0.5
      %v422 = vadd.f32 %v406, 0.5
      %v423 = vadd.f32 %v407, 0.5
      %v424 = vadd.f32 %v408, 0.5
      %v425 = vadd.f32 %v409, 0.5
      %v426 = vadd.f32 %v410, 0.5
      %v427 = vadd.f32 %v411, 0.5
      %v428 = vadd.f32 %v412, 0.5
      %v429 = vadd.f32 %v413, 0.5
      %v430 = vld [vmem:[%s3] sm:$0xff]
      %v431 = vld [vmem:[%s3 + $0x8] sm:$0xff]
      %v432 = vld [vmem:[%s3 + $0x10] sm:$0xff]
      %v433 = vld [vmem:[%s3 + $0x18] sm:$0xff]
      %v434 = vld [vmem:[%s3 + $0x20] sm:$0xff]
      %v435 = vld [vmem:[%s3 + $0x28] sm:$0xff]
      %v436 = vld [vmem:[%s3 + $0x30] sm:$0xff]
      %v437 = vld [vmem:[%s3 + $0x38] sm:$0xff]
      %v438 = vld [vmem:[%s4] sm:$0x1]
      %v440 = vperm.slane %v438, 0
      %vm442 = vcmask 523264
      %v444 = vsel %vm442, %v414, 0
      %v447 = vsel %vm442, %v415, 0
      %v450 = vsel %vm442, %v416, 0
      %v453 = vsel %vm442, %v417, 0
      %v456 = vsel %vm442, %v418, 0
      %v459 = vsel %vm442, %v419, 0
      %v462 = vsel %vm442, %v420, 0
      %v465 = vsel %vm442, %v421, 0
      %v468 = vsel %vm442, %v422, 0
      %v471 = vsel %vm442, %v423, 0
      %v474 = vsel %vm442, %v424, 0
      %v477 = vsel %vm442, %v425, 0
      %v480 = vsel %vm442, %v426, 0
      %v483 = vsel %vm442, %v427, 0
      %v486 = vsel %vm442, %v428, 0
      %v489 = vsel %vm442, %v429, 0
      %491 = vmatpush.msra.mxu0 0.0
      %492 = vmatpush.msra.mxu0 0.0
      %493 = vmatpush.msra.mxu0 0.0
      %494 = vmatpush.msra.mxu0 0.0
      %495 = vmatpush.msra.mxu0 0.0
      %496 = vmatpush.msra.mxu0 0.0
      %497 = vmatpush.msra.mxu0 0.0
      %498 = vmatpush.msra.mxu0 0.0
      %499 = vmatpush.msra.mxu0 %v437
      %500 = vmatpush.msra.mxu0 %v436
      %501 = vmatpush.msra.mxu0 %v435
      %502 = vmatpush.msra.mxu0 %v434
      %503 = vmatpush.msra.mxu0 %v433
      %504 = vmatpush.msra.mxu0 %v432
      %505 = vmatpush.msra.mxu0 %v431
      %506 = vmatpush.msra.mxu0 %v430
      %507 = vmatmul.f32.gmra.mxu0 %v444
      %v508 = vpop.f32.mrf.mxu0
      %v509 = vadd.f32 %v440, %v508
      %510 = vmatmul.f32.gmra.mxu0 %v447
      %v511 = vpop.f32.mrf.mxu0
      %v512 = vadd.f32 %v440, %v511
      %513 = vmatmul.f32.gmra.mxu0 %v450
      %v514 = vpop.f32.mrf.mxu0
      %v515 = vadd.f32 %v440, %v514
      %516 = vmatmul.f32.gmra.mxu0 %v453
      %v517 = vpop.f32.mrf.mxu0
      %v518 = vadd.f32 %v440, %v517
      %519 = vmatmul.f32.gmra.mxu0 %v456
      %v520 = vpop.f32.mrf.mxu0
      %v521 = vadd.f32 %v440, %v520
      %522 = vmatmul.f32.gmra.mxu0 %v459
      %v523 = vpop.f32.mrf.mxu0
      %v524 = vadd.f32 %v440, %v523
      %525 = vmatmul.f32.gmra.mxu0 %v462
      %v526 = vpop.f32.mrf.mxu0
      %v527 = vadd.f32 %v440, %v526
      %528 = vmatmul.f32.gmra.mxu0 %v465
      %v529 = vpop.f32.mrf.mxu0
      %v530 = vadd.f32 %v440, %v529
      %531 = vmatmul.f32.gmra.mxu0 %v468
      %v532 = vpop.f32.mrf.mxu0
      %v533 = vadd.f32 %v440, %v532
      %534 = vmatmul.f32.gmra.mxu0 %v471
      %v535 = vpop.f32.mrf.mxu0
      %v536 = vadd.f32 %v440, %v535
      %537 = vmatmul.f32.gmra.mxu0 %v474
      %v538 = vpop.f32.mrf.mxu0
      %v539 = vadd.f32 %v440, %v538
      %540 = vmatmul.f32.gmra.mxu0 %v477
      %v541 = vpop.f32.mrf.mxu0
      %v542 = vadd.f32 %v440, %v541
      %543 = vmatmul.f32.gmra.mxu0 %v480
      %v544 = vpop.f32.mrf.mxu0
      %v545 = vadd.f32 %v440, %v544
      %546 = vmatmul.f32.gmra.mxu0 %v483
      %v547 = vpop.f32.mrf.mxu0
      %v548 = vadd.f32 %v440, %v547
      %549 = vmatmul.f32.gmra.mxu0 %v486
      %v550 = vpop.f32.mrf.mxu0
      %v551 = vadd.f32 %v440, %v550
      %552 = vmatmul.f32.gmra.mxu0 %v489
      %v553 = vpop.f32.mrf.mxu0
      %v554 = vadd.f32 %v440, %v553
      %555 = vdwg.mxu0
      %v556 = vmul.f32 %v509, 0.5
      %v557 = vmul.f32 %v512, 0.5
      %v558 = vmul.f32 %v515, 0.5
      %v559 = vmul.f32 %v518, 0.5
      %v560 = vmul.f32 %v521, 0.5
      %v561 = vmul.f32 %v524, 0.5
      %v562 = vmul.f32 %v527, 0.5
      %v563 = vmul.f32 %v530, 0.5
      %v564 = vmul.f32 %v533, 0.5
      %v565 = vmul.f32 %v536, 0.5
      %v566 = vmul.f32 %v539, 0.5
      %v567 = vmul.f32 %v542, 0.5
      %v568 = vmul.f32 %v545, 0.5
      %v569 = vmul.f32 %v548, 0.5
      %v570 = vmul.f32 %v551, 0.5
      %v571 = vmul.f32 %v554, 0.5
      %v572 = vtanh.pop %v556
      %v573 = vtanh.pop %v557
      %v574 = vtanh.pop %v558
      %v575 = vtanh.pop %v559
      %v576 = vtanh.pop %v560
      %v577 = vtanh.pop %v561
      %v578 = vtanh.pop %v562
      %v579 = vtanh.pop %v563
      %v580 = vtanh.pop %v564
      %v581 = vtanh.pop %v565
      %v582 = vtanh.pop %v566
      %v583 = vtanh.pop %v567
      %v584 = vtanh.pop %v568
      %v585 = vtanh.pop %v569
      %v586 = vtanh.pop %v570
      %v587 = vtanh.pop %v571
      %v588 = vmul.f32 %v572, 0.5
      %v589 = vmul.f32 %v573, 0.5
      %v590 = vmul.f32 %v574, 0.5
      %v591 = vmul.f32 %v575, 0.5
      %v592 = vmul.f32 %v576, 0.5
      %v593 = vmul.f32 %v577, 0.5
      %v594 = vmul.f32 %v578, 0.5
      %v595 = vmul.f32 %v579, 0.5
      %v596 = vmul.f32 %v580, 0.5
      %v597 = vmul.f32 %v581, 0.5
      %v598 = vmul.f32 %v582, 0.5
      %v599 = vmul.f32 %v583, 0.5
      %v600 = vmul.f32 %v584, 0.5
      %v601 = vmul.f32 %v585, 0.5
      %v602 = vmul.f32 %v586, 0.5
      %v603 = vmul.f32 %v587, 0.5
      %v604 = vadd.f32 %v588, 0.5
      %v605 = vadd.f32 %v589, 0.5
      %v606 = vadd.f32 %v590, 0.5
      %v607 = vadd.f32 %v591, 0.5
      %v608 = vadd.f32 %v592, 0.5
      %v609 = vadd.f32 %v593, 0.5
      %v610 = vadd.f32 %v594, 0.5
      %v611 = vadd.f32 %v595, 0.5
      %v612 = vadd.f32 %v596, 0.5
      %v613 = vadd.f32 %v597, 0.5
      %v614 = vadd.f32 %v598, 0.5
      %v615 = vadd.f32 %v599, 0.5
      %v616 = vadd.f32 %v600, 0.5
      %v617 = vadd.f32 %v601, 0.5
      %v618 = vadd.f32 %v602, 0.5
      %v619 = vadd.f32 %v603, 0.5
      %vm620 = vcmask 130048
      %621 = vst.msk [vmem:[%s226] sm:$0xff] %vm620, %v604
      %622 = vst.msk [vmem:[%s226 + $0x8] sm:$0xff] %vm620, %v605
      %623 = vst.msk [vmem:[%s226 + $0x10] sm:$0xff] %vm620, %v606
      %624 = vst.msk [vmem:[%s226 + $0x18] sm:$0xff] %vm620, %v607
      %625 = vst.msk [vmem:[%s226 + $0x20] sm:$0xff] %vm620, %v608
      %626 = vst.msk [vmem:[%s226 + $0x28] sm:$0xff] %vm620, %v609
      %627 = vst.msk [vmem:[%s226 + $0x30] sm:$0xff] %vm620, %v610
      %628 = vst.msk [vmem:[%s226 + $0x38] sm:$0xff] %vm620, %v611
      %629 = vst.msk [vmem:[%s226 + $0x40] sm:$0xff] %vm620, %v612
      %630 = vst.msk [vmem:[%s226 + $0x48] sm:$0xff] %vm620, %v613
      %631 = vst.msk [vmem:[%s226 + $0x50] sm:$0xff] %vm620, %v614
      %632 = vst.msk [vmem:[%s226 + $0x58] sm:$0xff] %vm620, %v615
      %633 = vst.msk [vmem:[%s226 + $0x60] sm:$0xff] %vm620, %v616
      %634 = vst.msk [vmem:[%s226 + $0x68] sm:$0xff] %vm620, %v617
      %635 = vst.msk [vmem:[%s226 + $0x70] sm:$0xff] %vm620, %v618
      %636 = vst.msk [vmem:[%s226 + $0x78] sm:$0xff] %vm620, %v619
      %s637 = smul.u32 16, %s16
      %p638 = scmp.lt.s32.totalorder %s637, 31
      %s639 = scalar_select %p638, %s637, 31
      %s640 = smul.addr %s639, 8
      %s641 = scalar_lea.vmem %s5, %s640
      // Predicated region
      $region41: #{sequential_perception.1} parent=39 // pred_check
        %p642 = pneg %p144
      $region42: #{sequential_perception.1} parent=39 // pred_check_branch
        %644 = sbr.rel (%p642) target = $region44
      $region43: #{sequential_perception.1} parent=39 // pred_region
        %s645 = smul.u32 16, %s16
      $region44: #{sequential_perception.1} parent=39 // pred_fallthru
        _
    $region40: #{sequential_perception.1} parent=5 // pred_fallthru
      _
    %p646 = scmp.le.s32.totalorder 2, %s11
    // Predicated region
    $region45: #{sequential_perception.1} parent=5 // pred_check
      %p647 = pneg %p646
    $region46: #{sequential_perception.1} parent=5 // pred_check_branch
      %649 = sbr.rel (%p647) target = $region48
    $region47: #{sequential_perception.1} parent=5 // pred_region
      %s650 = ssub.s32 %s11, 2
      // Predicated region
      $region49: #{sequential_perception.1} parent=47 // pred_check
        %p651 = pneg %p150
      $region50: #{sequential_perception.1} parent=47 // pred_check_branch
        %653 = sbr.rel (%p651) target = $region52
      $region51: #{sequential_perception.1} parent=47 // pred_region
        %s654 = smul.u32 16, %s17
        %p655 = scmp.lt.s32.totalorder %s654, 31
        %s656 = scalar_select %p655, %s654, 31
        %s657 = smul.addr %s656, 8
        %s658 = scalar_lea.vmem %s5, %s657
      $region52: #{sequential_perception.1} parent=47 // pred_fallthru
        _
    $region48: #{sequential_perception.1} parent=5 // pred_fallthru
      _
  $region6: #{sequential_perception.1} parent=0 // loop_footer
    %s15 = sadd.s32 1, %s11
  $region7: #{sequential_perception.1} parent=0 // loop_footer_branch
    %10 = sbr.rel target = $region3
  $region8: #{sequential_perception.1} parent=0 // loop_exit
    _

</llo_original>
